<compile_context>
chip_gen: v7x
topology: tpu7x:2x2x1
jax: 0.10.0
libtpu: 0.0.40
codegen_flags: <defaults>
</compile_context>

<pallas_src>
import jax
import jax.numpy as jnp
from jax import lax
from jax.experimental import pallas as pl
from jax.experimental.pallas import tpu as pltpu


_LANE = 128
_SUBLANE = 8
_MAX_TB = 2048                       # hard cap on rows per batch tile
_TARGET_TILE_BYTES = 2 << 20         # aim for ~2 MiB lane-dense output tiles
_ONEHOT_MAX_E = 2048                 # one-hot MXU gather up to this table height
_ONEHOT_WORKSET_BYTES = 4 << 20      # bound on the (TB, E) one-hot working set
_SINGLE_BUFFER_TABLE_MIN = 4 << 20   # single-buffer the resident table above this
_RESIDENT_BUDGET_FRACTION = 0.75     # fraction of physical VMEM for the resident path
_RESIDENT_TILE_ALLOWANCE = 8 << 20   # VMEM slack reserved for tiles in the budget check
_HBM_INFLIGHT = 8                    # in-flight row DMAs in the HBM gather


def _round_up(x, m):
    return (x + m - 1) // m * m


def _vmem_capacity_bytes():
    """Per-core physical VMEM (generation-aware); conservative fallback = v7x."""
    try:
        cap = int(pltpu.get_tpu_info().vmem_capacity_bytes)
        if cap > 0:
            return cap
    except Exception:
        pass
    return 64 * 1024 * 1024


def _vmem_limit_for(need_bytes, capacity):
    """vmem_limit_bytes = computed need + modest headroom (None -> default limit)."""
    if need_bytes <= 12 * 1024 * 1024:
        return None
    return int(min(need_bytes + (16 << 20), max(capacity - (2 << 20), need_bytes)))


def _choose_tb(b, e, dp, itemsize, use_onehot):
    """Rows per batch tile: ~2 MiB output tiles (amortizes ~600-cycle grid-step
    overhead), bounded by the one-hot working set and the (padded) batch."""
    rows = _TARGET_TILE_BYTES // max(dp * itemsize, 1)
    if use_onehot:
        rows = min(rows, _ONEHOT_WORKSET_BYTES // (4 * max(e, 1)))
    rows = min(rows, _MAX_TB, _round_up(b, _SUBLANE))
    rows = max(_SUBLANE, (rows // _SUBLANE) * _SUBLANE)
    return int(rows)


def _table_spec_kwargs(table_bytes):
    # Single-buffer large resident tables (block index is constant along the
    # batch axis, it only changes per channel) -> halves the table's VMEM
    # footprint, which roughly doubles what stays resident on v7x's 64 MiB.
    if table_bytes >= _SINGLE_BUFFER_TABLE_MIN:
        return {"pipeline_mode": pl.Buffered(1)}, 1
    return {}, 2


# --------------------------------------------------------------------------
# Path 1: one-hot MXU gather (small/medium E), table resident in VMEM.
# --------------------------------------------------------------------------
def _onehot_gather_kernel(idx_ref, table_ref, out_ref):
    """out[r] = table[idx[r]] via (TB, E) one-hot x (E, Dp) MXU matmul.

    idx_ref:   (TB, 1) int32 VMEM tile of clamped indices.
    table_ref: (E, Dp) channel table, resident in VMEM.
    out_ref:   (TB, Dp) lane-dense output tile.
    """
    e = table_ref.shape[0]
    idx = idx_ref[...]                                            # (TB, 1) int32
    iota = lax.broadcasted_iota(jnp.int32, (idx.shape[0], e), 1)  # (TB, E)
    onehot = (iota == idx).astype(jnp.float32)                    # int cmp -> f32 (v5e-safe)
    onehot = onehot.astype(table_ref.dtype)                       # cast only for the MXU dot
    out = jnp.dot(onehot, table_ref[...], preferred_element_type=jnp.float32)
    out_ref[...] = out.astype(out_ref.dtype)


def _resident_onehot_gather(tables, flat_idx, *, capacity):
    c, e, dp = tables.shape
    b = flat_idx.shape[0]
    itemsize = jnp.dtype(tables.dtype).itemsize

    tb = _choose_tb(b, e, dp, itemsize, use_onehot=True)
    bp = _round_up(b, tb)
    idx2d = jnp.pad(flat_idx, (0, bp - b)).reshape(bp, 1)

    table_bytes = e * dp * itemsize
    spec_kwargs, n_bufs = _table_spec_kwargs(table_bytes)
    vmem_need = (table_bytes * n_bufs           # resident table
                 + 2 * tb * dp * itemsize       # double-buffered output tile
                 + 2 * tb * 4                   # index tile
                 + 2 * tb * e * 4               # iota / one-hot intermediates
                 + tb * dp * 4)                 # f32 matmul accumulator

    grid_spec = pltpu.PrefetchScalarGridSpec(
        num_scalar_prefetch=0,
        grid=(c, bp // tb),
        in_specs=[
            pl.BlockSpec((tb, 1), lambda ci, bi: (bi, 0)),
            # Constant block index along the batch axis -> channel table is
            # DMA'd into VMEM once per channel and reused for every tile.
            pl.BlockSpec((None, e, dp), lambda ci, bi: (ci, 0, 0), **spec_kwargs),
        ],
        out_specs=pl.BlockSpec((None, tb, dp), lambda ci, bi: (ci, bi, 0)),
    )
    return pl.pallas_call(
        _onehot_gather_kernel,
        out_shape=jax.ShapeDtypeStruct((c, bp, dp), tables.dtype),
        grid_spec=grid_spec,
        compiler_params=pltpu.CompilerParams(
            dimension_semantics=("parallel", "parallel"),
            vmem_limit_bytes=_vmem_limit_for(vmem_need, capacity),
        ),
    )(idx2d, tables)


# --------------------------------------------------------------------------
# Path 2: grouped row gather (large E), table resident in VMEM.
# --------------------------------------------------------------------------
def _loop_gather_kernel(idx_ref, table_ref, out_ref):
    """8-row grouped gather from a VMEM-resident table with dense sublane
    stores; lane dim processed in <=512-lane chunks to bound live vregs.

    idx_ref:   (Bp,) int32 in SMEM (scalar prefetch).
    table_ref: (E, Dp) channel table, resident in VMEM.
    out_ref:   (TB, Dp) lane-dense output tile.
    """
    tb, dp = out_ref.shape
    n_groups = tb // _SUBLANE
    base = pl.program_id(1) * tb
    lane_chunk = dp if dp <= 512 else 512

    def body(g, carry):
        off = pl.multiple_of(g * _SUBLANE, _SUBLANE)
        row_ids = [idx_ref[base + off + s] for s in range(_SUBLANE)]
        for c0 in range(0, dp, lane_chunk):                       # static lane chunks
            width = min(lane_chunk, dp - c0)
            rows = [table_ref[pl.ds(row_ids[s], 1), pl.ds(c0, width)]
                    for s in range(_SUBLANE)]
            out_ref[pl.ds(off, _SUBLANE), pl.ds(c0, width)] = jnp.concatenate(rows, axis=0)
        return carry

    # Fixed partial unroll: a fully rolled loop loses ~35% to lost
    # cross-iteration overlap; keep it smaller for wide rows (vreg pressure).
    unroll = min(n_groups, 8 if dp <= 256 else 4)
    lax.fori_loop(0, n_groups, body, 0, unroll=unroll)


def _resident_loop_gather(tables, flat_idx, *, capacity):
    c, e, dp = tables.shape
    b = flat_idx.shape[0]
    itemsize = jnp.dtype(tables.dtype).itemsize

    tb = _choose_tb(b, e, dp, itemsize, use_onehot=False)
    bp = _round_up(b, tb)
    idx_p = jnp.pad(flat_idx, (0, bp - b))

    table_bytes = e * dp * itemsize
    spec_kwargs, n_bufs = _table_spec_kwargs(table_bytes)
    vmem_need = table_bytes * n_bufs + 3 * tb * dp * itemsize

    grid_spec = pltpu.PrefetchScalarGridSpec(
        num_scalar_prefetch=1,
        grid=(c, bp // tb),
        in_specs=[
            pl.BlockSpec((None, e, dp), lambda ci, bi, idx_ref: (ci, 0, 0),
                         **spec_kwargs),
        ],
        out_specs=pl.BlockSpec((None, tb, dp), lambda ci, bi, idx_ref: (ci, bi, 0)),
    )
    return pl.pallas_call(
        _loop_gather_kernel,
        out_shape=jax.ShapeDtypeStruct((c, bp, dp), tables.dtype),
        grid_spec=grid_spec,
        compiler_params=pltpu.CompilerParams(
            dimension_semantics=("parallel", "parallel"),
            vmem_limit_bytes=_vmem_limit_for(vmem_need, capacity),
        ),
    )(idx_p, tables)


# --------------------------------------------------------------------------
# Path 3: HBM-resident table, manual batched gather with in-flight row DMAs.
# --------------------------------------------------------------------------
def _hbm_gather_kernel(idx_ref, tables_hbm, out_ref, sems):
    """Gather TB rows of one channel from the HBM table into a lane-dense
    (TB, Dp) output tile, keeping _HBM_INFLIGHT row DMAs in flight.

    idx_ref:    (Bp,) int32 in SMEM (scalar prefetch).
    tables_hbm: (C, E, Dp) full stacked tables, memory_space=pl.ANY (HBM).
    out_ref:    (TB, Dp) output tile in VMEM (rows DMA'd straight into place).
    sems:       (_HBM_INFLIGHT,) DMA semaphores.
    """
    ci = pl.program_id(0)
    tb = out_ref.shape[0]
    base = pl.program_id(1) * tb

    def _copy(r, slot):
        return pltpu.make_async_copy(
            tables_hbm.at[ci, pl.ds(idx_ref[base + r], 1), :],
            out_ref.at[pl.ds(r, 1), :],
            sems.at[slot],
        )

    # Prime the ring: tb is always a multiple of 8 >= _HBM_INFLIGHT.
    for r in range(_HBM_INFLIGHT):
        _copy(r, r).start()

    def body(r, carry):
        slot = r % _HBM_INFLIGHT
        _copy(r, slot).wait()

        @pl.when(r + _HBM_INFLIGHT < tb)
        def _():
            _copy(r + _HBM_INFLIGHT, slot).start()

        return carry

    lax.fori_loop(0, tb, body, 0)


def _hbm_batched_gather(tables, flat_idx, *, capacity):
    c, e, dp = tables.shape
    b = flat_idx.shape[0]
    itemsize = jnp.dtype(tables.dtype).itemsize

    tb = _choose_tb(b, e, dp, itemsize, use_onehot=False)
    bp = _round_up(b, tb)
    idx_p = jnp.pad(flat_idx, (0, bp - b))
    vmem_need = 2 * tb * dp * itemsize + (1 << 20)

    grid_spec = pltpu.PrefetchScalarGridSpec(
        num_scalar_prefetch=1,
        grid=(c, bp // tb),
        in_specs=[pl.BlockSpec(memory_space=pl.ANY)],   # table stays in HBM
        out_specs=pl.BlockSpec((None, tb, dp), lambda ci, bi, idx_ref: (ci, bi, 0)),
        scratch_shapes=[pltpu.SemaphoreType.DMA((_HBM_INFLIGHT,))],
    )
    return pl.pallas_call(
        _hbm_gather_kernel,
        out_shape=jax.ShapeDtypeStruct((c, bp, dp), tables.dtype),
        grid_spec=grid_spec,
        compiler_params=pltpu.CompilerParams(
            dimension_semantics=("parallel", "parallel"),
            vmem_limit_bytes=_vmem_limit_for(vmem_need, capacity),
        ),
    )(idx_p, tables)


# --------------------------------------------------------------------------
# Public entry point.
# --------------------------------------------------------------------------
def complex_embedding_lookup(tables, idx, *, gather_mode="auto", out_dim=None):
    """Fused multi-channel embedding lookup.

    tables:      (C, E, D) stacked channel tables (D ideally pre-padded to a
                 multiple of 128; ComplexEmbeddingPallas does this once).
    idx:         integer array of any shape (values clamped to [0, E-1]).
    gather_mode: "auto" | "onehot" | "loop" | "hbm".
    out_dim:     true embedding dim if `tables` is lane-padded.
    Returns a tuple of C arrays, each of shape idx.shape + (out_dim,).
    """
    c, e, d = tables.shape
    d_true = d if out_dim is None else int(out_dim)
    orig_shape = tuple(jnp.shape(idx))
    flat_idx = jnp.clip(jnp.asarray(idx).reshape(-1).astype(jnp.int32), 0, e - 1)
    b = flat_idx.shape[0]
    if b == 0:
        empty = jnp.zeros((c,) + orig_shape + (d_true,), tables.dtype)
        return tuple(empty[ci] for ci in range(c))

    dp = _round_up(d, _LANE)
    if dp != d:
        # Prefer pre-padding the tables once (the module constructor does);
        # this call-time pad is a full extra table copy.
        tables = jnp.pad(tables, ((0, 0), (0, 0), (0, dp - d)))

    itemsize = jnp.dtype(tables.dtype).itemsize
    capacity = _vmem_capacity_bytes()
    budget = int(capacity * _RESIDENT_BUDGET_FRACTION)

    table_bytes = e * dp * itemsize
    _, n_bufs = _table_spec_kwargs(table_bytes)

    mode = gather_mode
    if mode == "auto":
        if table_bytes * n_bufs + _RESIDENT_TILE_ALLOWANCE > budget:
            mode = "hbm"
        elif e <= _ONEHOT_MAX_E:
            mode = "onehot"
        else:
            mode = "loop"

    if mode == "onehot":
        out = _resident_onehot_gather(tables, flat_idx, capacity=capacity)
    elif mode == "loop":
        out = _resident_loop_gather(tables, flat_idx, capacity=capacity)
    elif mode == "hbm":
        out = _hbm_batched_gather(tables, flat_idx, capacity=capacity)
    else:
        raise ValueError(f"unknown gather_mode: {gather_mode!r}")

    out = out[:, :b, :d_true].reshape((c,) + orig_shape + (d_true,))
    return tuple(out[ci] for ci in range(c))


class ComplexEmbeddingPallas:
    """JAX/Pallas port of toolbox/nn/ComplexEmbedding.ComplexEmbedding (forward)."""

    def __init__(self, num_entities, embedding_dim, num_channels=2, *, key,
                 dtype=jnp.float32):
        self.num_entities = num_entities
        self.embedding_dim = embedding_dim
        self.num_channels = num_channels
        # Xavier-normal init (matches module.init()); tables stacked (C, E, D).
        std = (2.0 / (num_entities + embedding_dim)) ** 0.5
        tables = std * jax.random.normal(
            key, (num_channels, num_entities, embedding_dim), dtype
        )
        # Pre-pad the lane dim to a multiple of 128 ONCE (no per-call pad).
        dp = _round_up(embedding_dim, _LANE)
        if dp != embedding_dim:
            tables = jnp.pad(tables, ((0, 0), (0, 0), (0, dp - embedding_dim)))
        self.tables = tables  # (C, E, Dp)

    def __call__(self, idx, **kwargs):
        return complex_embedding_lookup(
            self.tables, idx, out_dim=self.embedding_dim, **kwargs
        )

    def get_embeddings(self):
        return [self.tables[ci, :, : self.embedding_dim]
                for ci in range(self.num_channels)]

    def get_cat_embedding(self):
        return jnp.concatenate(self.get_embeddings(), axis=1)

    def scoring_all(self, complex_numbers):
        # Plain-JAX helper (XLA's matmul is already optimal here).
        tabs = self.get_embeddings()
        return tuple(jnp.dot(cn, tabs[i].T) for i, cn in enumerate(complex_numbers))


if __name__ == "__main__":
    key = jax.random.PRNGKey(0)
    k_params, k_idx, k_idx2, k_params2, k_idx3 = jax.random.split(key, 5)

    num_entities, embedding_dim, num_channels, batch = 32, 128, 2, 8
    module = ComplexEmbeddingPallas(
        num_entities, embedding_dim, num_channels, key=k_params
    )
    idx = jax.random.randint(k_idx, (batch,), 0, num_entities, dtype=jnp.int32)

    def ref_lookup(mod, ids):
        return tuple(
            jnp.take(mod.tables[ci, :, : mod.embedding_dim], ids, axis=0)
            for ci in range(mod.num_channels)
        )

    def check(outs, refs, label, rtol, atol):
        for ci, (o, r) in enumerate(zip(outs, refs)):
            assert o.shape == r.shape, f"{label}[{ci}]: shape {o.shape} vs {r.shape}"
            assert jnp.allclose(o, r, rtol=rtol, atol=atol), f"{label}[{ci}]: mismatch"

    refs = ref_lookup(module, idx)

    # 1. Default path: one-hot MXU gather, table resident in VMEM.
    #    (MXU matmul tolerance; gathered rows may round through the matmul.)
    outs = jax.block_until_ready(module(idx))
    check(outs, refs, "onehot", rtol=5e-3, atol=5e-4)

    # 2. Multi-dimensional index shapes (PyTorch nn.Embedding supports them too).
    idx2 = jax.random.randint(k_idx2, (2, 5), 0, num_entities, dtype=jnp.int32)
    outs2 = jax.block_until_ready(module(idx2))
    check(outs2, ref_lookup(module, idx2), "2d-idx", rtol=5e-3, atol=5e-4)

    # 3. Forced loop-gather path (used automatically when E > 2048 but the
    #    table still fits in VMEM) — pure copies, tight tolerance.
    outs3 = jax.block_until_ready(module(idx, gather_mode="loop"))
    check(outs3, refs, "loop", rtol=1e-6, atol=1e-6)

    # 4. Forced HBM manual-DMA batched-gather path (used automatically when the
    #    table exceeds the VMEM budget) — pure copies, tight tolerance.
    outs4 = jax.block_until_ready(module(idx, gather_mode="hbm"))
    check(outs4, refs, "hbm", rtol=1e-6, atol=1e-6)

    # 5. Embedding dim that is not a multiple of 128 (exercises the lane
    #    padding pre-computed in __init__) with 3 channels.
    module2 = ComplexEmbeddingPallas(16, 96, 3, key=k_params2)
    idx3 = jax.random.randint(k_idx3, (4,), 0, 16, dtype=jnp.int32)
    outs5 = jax.block_until_ready(module2(idx3))
    check(outs5, ref_lookup(module2, idx3), "padded-dim", rtol=5e-3, atol=5e-4)

    print("KERNEL_OK")
</pallas_src>

<mosaic_0001>
module attributes {stable_mosaic.version = 11 : i64} {
  func.func @_onehot_gather_kernel(%arg0: i32, %arg1: i32, %arg2: memref<8x1xi32, #tpu.memory_space<vmem>>, %arg3: memref<1x32x128xf32, #tpu.memory_space<vmem>>, %arg4: memref<1x8x128xf32, #tpu.memory_space<vmem>>) attributes {dimension_semantics = [#tpu.dimension_semantics<parallel>, #tpu.dimension_semantics<parallel>], iteration_bounds = array<i64: 2, 1>, scalar_prefetch = 0 : i64, scratch_operands = 0 : i64, tpu.core_type = #tpu.core_type<tc>, window_params = [{transform_indices = @transform_0, window_bounds = array<i64: 8, 1>}, {transform_indices = @transform_1, window_bounds = array<i64: 1, 32, 128>}, {transform_indices = @transform_2, window_bounds = array<i64: 1, 8, 128>}]} {
    %c0 = arith.constant 0 : index
    %c0_0 = arith.constant 0 : index
    %0 = vector.load %arg2[%c0, %c0_0] : memref<8x1xi32, #tpu.memory_space<vmem>>, vector<8x1xi32>
    %1 = tpu.iota {dimensions = array<i32: 1>} : vector<8x32xi32>
    %2 = vector.broadcast %0 : vector<8x1xi32> to vector<8x32xi32>
    %3 = arith.cmpi eq, %1, %2 : vector<8x32xi32>
    %4 = arith.extui %3 : vector<8x32xi1> to vector<8x32xi32>
    %5 = arith.sitofp %4 : vector<8x32xi32> to vector<8x32xf32>
    %c0_1 = arith.constant 0 : index
    %c0_2 = arith.constant 0 : index
    %c0_3 = arith.constant 0 : index
    %6 = vector.load %arg3[%c0_1, %c0_2, %c0_3] : memref<1x32x128xf32, #tpu.memory_space<vmem>>, vector<1x32x128xf32>
    %7 = vector.shape_cast %6 : vector<1x32x128xf32> to vector<32x128xf32>
    %cst = arith.constant dense<0.000000e+00> : vector<8x128xf32>
    %8 = tpu.matmul %5, %7, %cst {dimension_numbers = #tpu.dot_dimension_numbers<[1], [0], [0], [1], [0, 0, 1, 1], [], []>} : vector<8x32xf32>, vector<32x128xf32>, vector<8x128xf32> -> vector<8x128xf32>
    %c0_4 = arith.constant 0 : index
    %c0_5 = arith.constant 0 : index
    %c0_6 = arith.constant 0 : index
    %9 = vector.load %arg4[%c0_4, %c0_5, %c0_6] : memref<1x8x128xf32, #tpu.memory_space<vmem>>, vector<1x8x128xf32>
    %10 = vector.shape_cast %9 : vector<1x8x128xf32> to vector<8x128xf32>
    %11 = vector.shape_cast %8 : vector<8x128xf32> to vector<1x8x128xf32>
    tpu.vector_store %arg4[%c0_4, %c0_5, %c0_6], %11 {strides = array<i32>} : memref<1x8x128xf32, #tpu.memory_space<vmem>>, vector<1x8x128xf32>,
    return
  }
  func.func @transform_0(%arg0: i32, %arg1: i32) -> (i32, i32) {
    %c0_i32 = arith.constant 0 : i32
    %c0_i32_0 = arith.constant 0 : i32
    return %arg1, %c0_i32 : i32, i32
  }
  func.func @transform_1(%arg0: i32, %arg1: i32) -> (i32, i32, i32) {
    %c0_i32 = arith.constant 0 : i32
    %c0_i32_0 = arith.constant 0 : i32
    %c0_i32_1 = arith.constant 0 : i32
    return %arg0, %c0_i32, %c0_i32_0 : i32, i32, i32
  }
  func.func @transform_2(%arg0: i32, %arg1: i32) -> (i32, i32, i32) {
    %c0_i32 = arith.constant 0 : i32
    %c0_i32_0 = arith.constant 0 : i32
    return %arg0, %arg1, %c0_i32 : i32, i32, i32
  }
}

</mosaic_0001>

<llo_original>
// kernel: tpu_custom_call.1
$region0: #{tpu_custom_call.1}
  #allocation0 [shape = 'u32[]', space=smem, size = 0x4, offset = 0x4, fixed_abs, tag = 'smem constant byte address 0x4 - core index']
  #allocation1 [shape = 'u32[144,128]{1,0:T(1,128)}', space=vmem, size = 0x12000, scoped, tag = 'internal scratch']
  %s0 = inlined_call_operand.vmem [shape: s32[8,1], index: 0, kind: input, shape index: {}]
  %s1 = inlined_call_operand.hbm [shape: f32[2,32,128], index: 1, kind: input, shape index: {}]
  %s2 = inlined_call_operand.hbm [shape: f32[2,8,128], index: 2, kind: output, shape index: {}]
  %s3 = sld [smem:[#allocation0]]
  $region45: #{tpu_custom_call.1} parent=0
    _
  %s5 = ssub.s32 1, %s3
  %s6 = scalar_select 0, %s5, %s3
  $region1: #{tpu_custom_call.1} parent=0
    #allocation2 [shape = 'u8[32768]{0}', space=vmem, size = 0x8000, scoped, tag = 'input window, operand 1']
    #allocation3 [shape = 's32[2]{0}', space=sflag, size = 0x8, scoped, tag = 'scoped memory for tpu_custom_call.1']
    #allocation4 [shape = 's32[2]{0}', space=sflag, size = 0x8, scoped, tag = 'scoped memory for tpu_custom_call.1']
    #allocation5 [shape = 'u8[8192]{0}', space=vmem, size = 0x2000, scoped, tag = 'output window, operand 0']
    %7 = vsyncpa [#allocation3], 0
    %s8 = scalar_lea.sflag [#allocation3], 1
    %9 = vsyncpa %s8, 0
    %10 = vsyncpa [#allocation4], 0
    %s11 = scalar_lea.sflag [#allocation4], 1
    %12 = vsyncpa %s11, 0
    loop: start=0, step=1, limit=4
    $region2: #{tpu_custom_call.1} parent=1 // loop_pre_header
      _
    $region3: #{tpu_custom_call.1} parent=1 // loop_header
      %s14 = sphi 0, %s18
      %p15 = scmp.ge.s32.totalorder %s14, 4
      %s21 = sphi 0, %s33
      %s22 = sphi 0, %s29
      %s23 = sphi 0, %s21
      %s24 = sphi 0, %s22
      %s25 = sphi 0, %s23
      %s26 = sphi 0, %s24
      %s36 = sphi 0, %s38
      %s39 = sphi 0, %s36
      %s40 = sphi 0, %s39
      %s56 = sphi 0, %s40
      %s62 = sphi 0, %s64
      %s65 = sphi 0, %s62
      %s66 = sphi 0, %s65
      %s82 = sphi 0, %s66
      %s90 = sphi 0, %s92
      %s93 = sphi 0, %s90
      %s94 = sphi 0, %s93
      %s110 = sphi 0, %s94
    $region4: #{tpu_custom_call.1} parent=1 // loop_header_branch
      %17 = sbr.rel (%p15) target = $region8
    $region5: #{tpu_custom_call.1} parent=1 // loop_body
      %s19 = ssub.s32 %s14, 1
      %s20 = ssub.s32 %s14, 2
      %s27 = sadd.s32 1, %s22
      %p28 = scmp.ge.s32.totalorder %s27, 1
      %s29 = scalar_select %p28, 0, %s27
      %s30 = sadd.s32 1, %s21
      %s31 = scalar_select %p28, %s30, %s21
      %p32 = scmp.ge.s32.totalorder %s31, 2
      %s33 = scalar_select %p32, 0, %s31
      %s34 = ssub.s32 %s22, %s29
      %p35 = scmp.eq.s32.totalorder %s34, 0
      %s37 = sadd.s32 %s36, 1
      %s38 = scalar_select %p35, %s36, %s37
      %p41 = pneg %p35
      %p42 = scmp.eq.s32.totalorder %s14, 1
      %p43 = por %p41, %p42
      %p44 = scmp.ne.s32.totalorder %s36, %s39
      %p45 = scmp.eq.s32.totalorder %s14, 0
      %p46 = por %p44, %p45
      %p47 = scmp.ne.s32.totalorder %s36, %s39
      %p48 = scmp.eq.s32.totalorder %s19, 1
      %p49 = por %p47, %p48
      %p50 = scmp.ne.s32.totalorder %s39, %s40
      %p51 = scmp.eq.s32.totalorder %s19, 0
      %p52 = por %p50, %p51
      %p53 = scmp.ne.s32.totalorder %s39, %s40
      %p54 = scmp.eq.s32.totalorder %s20, 1
      %p55 = por %p53, %p54
      %p57 = scmp.ne.s32.totalorder %s40, %s56
      %p58 = scmp.eq.s32.totalorder %s20, 0
      %p59 = por %p57, %p58
      %s60 = ssub.s32 %s21, %s33
      %p61 = scmp.eq.s32.totalorder %s60, 0
      %s63 = sadd.s32 %s62, 1
      %s64 = scalar_select %p61, %s62, %s63
      %p67 = pneg %p61
      %p68 = scmp.eq.s32.totalorder %s14, 1
      %p69 = por %p67, %p68
      %p70 = scmp.ne.s32.totalorder %s62, %s65
      %p71 = scmp.eq.s32.totalorder %s14, 0
      %p72 = por %p70, %p71
      %p73 = scmp.ne.s32.totalorder %s62, %s65
      %p74 = scmp.eq.s32.totalorder %s19, 1
      %p75 = por %p73, %p74
      %p76 = scmp.ne.s32.totalorder %s65, %s66
      %p77 = scmp.eq.s32.totalorder %s19, 0
      %p78 = por %p76, %p77
      %p79 = scmp.ne.s32.totalorder %s65, %s66
      %p80 = scmp.eq.s32.totalorder %s20, 1
      %p81 = por %p79, %p80
      %p83 = scmp.ne.s32.totalorder %s66, %s82
      %p84 = scmp.eq.s32.totalorder %s20, 0
      %p85 = por %p83, %p84
      %s86 = ssub.s32 %s21, %s33
      %s87 = ssub.s32 %s22, %s29
      %s88 = sor.u32 %s86, %s87
      %p89 = scmp.eq.s32.totalorder %s88, 0
      %s91 = sadd.s32 %s90, 1
      %s92 = scalar_select %p89, %s90, %s91
      %p95 = pneg %p89
      %p96 = scmp.eq.s32.totalorder %s14, 1
      %p97 = por %p95, %p96
      %p98 = scmp.ne.s32.totalorder %s90, %s93
      %p99 = scmp.eq.s32.totalorder %s14, 0
      %p100 = por %p98, %p99
      %p101 = scmp.ne.s32.totalorder %s90, %s93
      %p102 = scmp.eq.s32.totalorder %s19, 1
      %p103 = por %p101, %p102
      %p104 = scmp.ne.s32.totalorder %s93, %s94
      %p105 = scmp.eq.s32.totalorder %s19, 0
      %p106 = por %p104, %p105
      %p107 = scmp.ne.s32.totalorder %s93, %s94
      %p108 = scmp.eq.s32.totalorder %s20, 1
      %p109 = por %p107, %p108
      %p111 = scmp.ne.s32.totalorder %s94, %s110
      %p112 = scmp.eq.s32.totalorder %s20, 0
      %p113 = por %p111, %p112
      %p114 = scmp.le.s32.totalorder 1, %s14
      %p115 = scmp.lt.s32.totalorder %s14, 3
      %p116 = pnand %p114, %p115
      %p117 = pneg %p116
      // Predicated region
      $region9: #{tpu_custom_call.1} parent=5 // pred_check
        _
      $region10: #{tpu_custom_call.1} parent=5 // pred_check_branch
        %119 = sbr.rel (%p116) target = $region12
      $region11: #{tpu_custom_call.1} parent=5 // pred_region
        %s120 = ssub.s32 %s14, 1
        // Predicated region
        $region13: #{tpu_custom_call.1} parent=11 // pred_check
          %p121 = pneg %p52
        $region14: #{tpu_custom_call.1} parent=11 // pred_check_branch
          %123 = sbr.rel (%p121) target = $region16
        $region15: #{tpu_custom_call.1} parent=11 // pred_region
          %p124 = scmp.lt.s32.totalorder %s24, 0
          %s125 = scalar_select %p124, %s24, 0
          %s126 = smul.addr %s125, 8
          %s127 = scalar_lea.vmem %s0, %s126
        $region16: #{tpu_custom_call.1} parent=11 // pred_fallthru
          _
      $region12: #{tpu_custom_call.1} parent=5 // pred_fallthru
        _
      %p128 = scmp.lt.s32.totalorder %s14, 2
      // Predicated region
      $region17: #{tpu_custom_call.1} parent=5 // pred_check
        %p129 = pneg %p128
      $region18: #{tpu_custom_call.1} parent=5 // pred_check_branch
        %131 = sbr.rel (%p129) target = $region20
      $region19: #{tpu_custom_call.1} parent=5 // pred_region
        // Predicated region
        $region21: #{tpu_custom_call.1} parent=19 // pred_check
          %p132 = pneg %p72
        $region22: #{tpu_custom_call.1} parent=19 // pred_check_branch
          %134 = sbr.rel (%p132) target = $region24
        $region23: #{tpu_custom_call.1} parent=19 // pred_region
          %s135 = sand.u32 %s62, 1
          %s136 = scalar_lea.sflag [#allocation3], %s135
          %s137 = sand.u32 %s62, 1
          %s138 = smul.addr %s137, 32
          %s139 = scalar_lea.vmem [#allocation2], %s138
          %s141 = ssub.s32 512, 512
          %142 = vsyncadd %s136, %s141
          %s143 = smul.addr %s21, 4
          %s144 = smul.addr %s143, 128
          %s145 = scalar_lea.hbm %s1, %s144
          %s146 = sshll.u32 %s139, 4
          %s147 = int_to_ptr.vmem [resolvable:$true] %s146
          %152 = dma.hbm_to_vmem [thread:$0]  %s145, 512, %s147, %s136, 128, 128, 8
        $region24: #{tpu_custom_call.1} parent=19 // pred_fallthru
          _
      $region20: #{tpu_custom_call.1} parent=5 // pred_fallthru
        _
      %p153 = scmp.le.s32.totalorder 1, %s14
      %p154 = scmp.lt.s32.totalorder %s14, 3
      %p155 = pnand %p153, %p154
      %p156 = pneg %p155
      // Predicated region
      $region25: #{tpu_custom_call.1} parent=5 // pred_check
        _
      $region26: #{tpu_custom_call.1} parent=5 // pred_check_branch
        %158 = sbr.rel (%p155) target = $region28
      $region27: #{tpu_custom_call.1} parent=5 // pred_region
        %s159 = ssub.s32 %s14, 1
        %s160 = sand.u32 %s65, 1
        %s161 = scalar_lea.sflag [#allocation3], %s160
        %s162 = sand.u32 %s65, 1
        %s163 = smul.addr %s162, 32
        %s164 = scalar_lea.vmem [#allocation2], %s163
        // Predicated region
        $region29: #{tpu_custom_call.1} parent=27 // pred_check
          %p165 = pneg %p78
        $region30: #{tpu_custom_call.1} parent=27 // pred_check_branch
          %167 = sbr.rel (%p165) target = $region32
        $region31: #{tpu_custom_call.1} parent=27 // pred_region
          %168 = dma.done %s161, 512
        $region32: #{tpu_custom_call.1} parent=27 // pred_fallthru
          _
        %p169 = scmp.lt.s32.totalorder %s24, 0
        %s170 = scalar_select %p169, %s24, 0
        %s171 = smul.addr %s170, 8
        %s172 = scalar_lea.vmem %s0, %s171
        %p173 = pneg %p52
        %p174 = pneg %p49
        %s175 = sand.u32 %s65, 1
        %s176 = scalar_lea.sflag [#allocation3], %s175
        %s177 = sand.u32 %s65, 1
        %s178 = smul.addr %s177, 32
        %s179 = scalar_lea.vmem [#allocation2], %s178
        %p180 = pneg %p78
        %p181 = pneg %p75
        %p182 = pneg %p106
        %p183 = pneg %p103
        %s184 = sand.u32 %s93, 1
        %s185 = scalar_lea.sflag [#allocation4], %s184
        %s186 = sand.u32 %s93, 1
        %s187 = smul.addr %s186, 8
        %s188 = scalar_lea.vmem [#allocation5], %s187
        %p189 = scmp.lt.s32.totalorder %s24, 0
        %s190 = scalar_select %p189, %s24, 0
        %s191 = smul.addr %s190, 8
        %s192 = scalar_lea.vmem %s0, %s191
        %v193 = vld [vmem:[%s192] sm:$0xff]
        %v194 = vlaneseq
        %v195 = vand.u32 %v194, 127
        %196 = vset.pattern.permute.xlu0 0
        %197 = vperm.xlu0 %196, %v193
        %v198 = vpop.permute.xlu0 %197
        %vm199 = vcmp.eq.s32.totalorder %v195, %v198
        %v200 = vsel %vm199, 1, 0
        %v201 = vcvt.s32.f32 %v200
        %v202 = vld [vmem:[%s164] sm:$0xff]
        %v203 = vld [vmem:[%s164 + $0x8] sm:$0xff]
        %v204 = vld [vmem:[%s164 + $0x10] sm:$0xff]
        %v205 = vld [vmem:[%s164 + $0x18] sm:$0xff]
        %vm206 = vcmask 261120
        %v208 = vsel %vm206, %v201, 0
        %210 = vmatprep.subr.mxu0 0.0
        %211 = vmatpush1.msra.mxu0 %v202
        %212 = vmatprep.subr.mxu0 0.0
        %213 = vmatpush1.msra.mxu0 %v203
        %214 = vmatprep.subr.mxu0 0.0
        %215 = vmatpush1.msra.mxu0 %v204
        %216 = vmatprep.subr.mxu0 0.0
        %217 = vmatpush1.msra.mxu0 %v205
        %218 = vmatprep.subr.mxu0 0.0
        %219 = vmatpush1.msra.mxu0 0.0
        %220 = vmatprep.subr.mxu0 0.0
        %221 = vmatpush1.msra.mxu0 0.0
        %222 = vmatprep.subr.mxu0 0.0
        %223 = vmatpush1.msra.mxu0 0.0
        %224 = vmatprep.subr.mxu0 0.0
        %225 = vmatpush1.msra.mxu0 0.0
        %226 = vmatprep.subr.mxu0 0.0
        %227 = vmatpush1.msra.mxu0 0.0
        %228 = vmatprep.subr.mxu0 0.0
        %229 = vmatpush1.msra.mxu0 0.0
        %230 = vmatprep.subr.mxu0 0.0
        %231 = vmatpush1.msra.mxu0 0.0
        %232 = vmatprep.subr.mxu0 0.0
        %233 = vmatpush1.msra.mxu0 0.0
        %234 = vmatprep.subr.mxu0 0.0
        %235 = vmatpush1.msra.mxu0 0.0
        %236 = vmatprep.subr.mxu0 0.0
        %237 = vmatpush1.msra.mxu0 0.0
        %238 = vmatprep.subr.mxu0 0.0
        %239 = vmatpush1.msra.mxu0 0.0
        %240 = vmatprep.subr.mxu0 0.0
        %241 = vmatpush1.msra.mxu0 0.0
        %242 = vmatprep.subr.mxu0 0.0
        %243 = vmatpush1.msra.mxu0 0.0
        %244 = vmatprep.subr.mxu0 0.0
        %245 = vmatpush1.msra.mxu0 0.0
        %246 = vmatprep.subr.mxu0 0.0
        %247 = vmatpush1.msra.mxu0 0.0
        %248 = vmatprep.subr.mxu0 0.0
        %249 = vmatpush1.msra.mxu0 0.0
        %250 = vmatprep.subr.mxu0 0.0
        %251 = vmatpush1.msra.mxu0 0.0
        %252 = vmatprep.subr.mxu0 0.0
        %253 = vmatpush1.msra.mxu0 0.0
        %254 = vmatprep.subr.mxu0 0.0
        %255 = vmatpush1.msra.mxu0 0.0
        %256 = vmatprep.subr.mxu0 0.0
        %257 = vmatpush1.msra.mxu0 0.0
        %258 = vmatprep.subr.mxu0 0.0
        %259 = vmatpush1.msra.mxu0 0.0
        %260 = vmatprep.subr.mxu0 0.0
        %261 = vmatpush1.msra.mxu0 0.0
        %262 = vmatprep.subr.mxu0 0.0
        %263 = vmatpush1.msra.mxu0 0.0
        %264 = vmatprep.subr.mxu0 0.0
        %265 = vmatpush1.msra.mxu0 0.0
        %266 = vmatprep.subr.mxu0 0.0
        %267 = vmatpush1.msra.mxu0 0.0
        %268 = vmatprep.subr.mxu0 0.0
        %269 = vmatpush1.msra.mxu0 0.0
        %270 = vmatprep.subr.mxu0 0.0
        %271 = vmatpush1.msra.mxu0 0.0
        %272 = vmatprep.subr.mxu0 0.0
        %273 = vmatpush1.msra.mxu0 0.0
        %274 = vmatprep.mubr.f32.mxu0 0.0
        %275 = vmatmul.mubr.f32.gmra.mrb[0].mxu0 %v208
        %v276 = vpop.f32.mrb[0].mxu0
        %v277 = vadd.f32 0.0, %v276
        %v278 = vpop.f32.mrb[0].mxu0
        %279 = vdwg.mxu0
        %280 = vst [vmem:[%s188] sm:$0xff] %v277
        %s281 = sand.u32 %s93, 1
        %s282 = scalar_lea.sflag [#allocation4], %s281
        %s283 = sand.u32 %s93, 1
        %s284 = smul.addr %s283, 8
        %s285 = scalar_lea.vmem [#allocation5], %s284
        // Predicated region
        $region33: #{tpu_custom_call.1} parent=27 // pred_check
          %p286 = pneg %p103
        $region34: #{tpu_custom_call.1} parent=27 // pred_check_branch
          %288 = sbr.rel (%p286) target = $region36
        $region35: #{tpu_custom_call.1} parent=27 // pred_region
          %s290 = ssub.s32 128, 128
          %291 = vsyncadd %s282, %s290
          %s292 = sadd.s32 %s24, %s23
          %s293 = smul.addr %s292, 128
          %s294 = scalar_lea.hbm %s2, %s293
          %s296 = sshll.u32 %s285, 4
          %s297 = int_to_ptr.vmem [resolvable:$true] %s296
          %299 = dma.vmem_to_hbm [thread:$0]  %s297, 128, %s294, %s282
        $region36: #{tpu_custom_call.1} parent=27 // pred_fallthru
          _
      $region28: #{tpu_custom_call.1} parent=5 // pred_fallthru
        _
      %p300 = scmp.le.s32.totalorder 2, %s14
      // Predicated region
      $region37: #{tpu_custom_call.1} parent=5 // pred_check
        %p301 = pneg %p300
      $region38: #{tpu_custom_call.1} parent=5 // pred_check_branch
        %303 = sbr.rel (%p301) target = $region40
      $region39: #{tpu_custom_call.1} parent=5 // pred_region
        %s304 = ssub.s32 %s14, 2
        // Predicated region
        $region41: #{tpu_custom_call.1} parent=39 // pred_check
          %p305 = pneg %p109
        $region42: #{tpu_custom_call.1} parent=39 // pred_check_branch
          %307 = sbr.rel (%p305) target = $region44
        $region43: #{tpu_custom_call.1} parent=39 // pred_region
          %s308 = sand.u32 %s94, 1
          %s309 = scalar_lea.sflag [#allocation4], %s308
          %s310 = sand.u32 %s94, 1
          %s311 = smul.addr %s310, 8
          %s312 = scalar_lea.vmem [#allocation5], %s311
          %313 = dma.done %s309, 128
        $region44: #{tpu_custom_call.1} parent=39 // pred_fallthru
          _
      $region40: #{tpu_custom_call.1} parent=5 // pred_fallthru
        _
    $region6: #{tpu_custom_call.1} parent=1 // loop_footer
      %s18 = sadd.s32 1, %s14
    $region7: #{tpu_custom_call.1} parent=1 // loop_footer_branch
      %13 = sbr.rel target = $region3
    $region8: #{tpu_custom_call.1} parent=1 // loop_exit
      _
    %314 = vsyncpa [#allocation3], 1
    %s315 = scalar_lea.sflag [#allocation3], 1
    %316 = vsyncpa %s315, 1
    %317 = vsyncpa [#allocation4], 1
    %s318 = scalar_lea.sflag [#allocation4], 1
    %319 = vsyncpa %s318, 1

</llo_original>
